<compile_context>
chip_gen: v7x
topology: tpu7x:2x2x1
jax: 0.10.0
libtpu: 0.0.40
codegen_flags: <defaults>
</compile_context>

<pallas_src>
import functools
import math

import jax
import jax.numpy as jnp
from jax.experimental import pallas as pl
from jax.experimental.pallas import tpu as pltpu


def _round_up(x, m):
    return ((x + m - 1) // m) * m


# ----------------------------------------------------------------------------
# Pallas kernel: one M-tile of   out = X_p @ W + b
# ----------------------------------------------------------------------------
def _patch_embed_kernel(x_ref, w_ref, b_ref, o_ref):
    # x_ref: (TM, K) bf16   w_ref: (K, E) bf16   b_ref: (1, E) f32   o_ref: (TM, E)
    acc = jnp.dot(x_ref[...], w_ref[...], preferred_element_type=jnp.float32)
    o_ref[...] = (acc + b_ref[...]).astype(o_ref.dtype)


def _patch_matmul(x_p, w, b, *, out_dtype, tm=1024):
    """x_p: (M, K) bf16, w: (K, E) bf16, b: (1, E) f32 -> (M, E) out_dtype."""
    M, K = x_p.shape
    E = w.shape[1]

    in_bytes = x_p.dtype.itemsize
    out_bytes = jnp.dtype(out_dtype).itemsize

    # Tile selection: as large as possible (per-grid-step overhead ~0.35us), but
    # (a) never larger than the (8-rounded) problem,
    # (b) keep >= 8 grid steps when there is enough work (v7x megacore + pipeline),
    # (c) stay well inside v7x's 64 MiB VMEM per TensorCore.
    tm_eff = min(tm, _round_up(max(M, 1), 8))
    while tm_eff > 256 and pl.cdiv(M, tm_eff) < 8:
        tm_eff = _round_up(tm_eff // 2, 8)

    def _vmem_need(t):
        return (2 * t * K * in_bytes          # double-buffered X_p tile
                + K * E * in_bytes + 4 * E    # resident weight + bias
                + 2 * t * E * out_bytes)      # double-buffered output tile

    vmem_budget = 48 << 20                    # headroom under v7x's 64 MiB/TC
    while tm_eff > 256 and _vmem_need(tm_eff) > vmem_budget:
        tm_eff = _round_up(tm_eff // 2, 8)
    # TODO(synk): for very large K*E (huge in_channel or embed_dim) the resident
    # weight alone can exceed the budget; that would need an extra K/E grid axis
    # with an f32 accumulator scratch.  Not needed at module-default sizes.

    grid_m = pl.cdiv(M, tm_eff)
    vmem_limit = int(min(max(_vmem_need(tm_eff) + (8 << 20), 32 << 20), 64 << 20))

    return pl.pallas_call(
        _patch_embed_kernel,
        out_shape=jax.ShapeDtypeStruct((M, E), out_dtype),
        grid_spec=pltpu.PrefetchScalarGridSpec(
            num_scalar_prefetch=0,
            grid=(grid_m,),
            in_specs=[
                pl.BlockSpec((tm_eff, K), lambda i: (i, 0)),  # patch rows (tiled over M)
                pl.BlockSpec((K, E), lambda i: (0, 0)),       # projection weight (resident)
                pl.BlockSpec((1, E), lambda i: (0, 0)),       # bias (resident)
            ],
            out_specs=pl.BlockSpec((tm_eff, E), lambda i: (i, 0)),
        ),
        compiler_params=pltpu.CompilerParams(
            dimension_semantics=("parallel",),
            vmem_limit_bytes=vmem_limit,
        ),
    )(x_p, w, b)


# ----------------------------------------------------------------------------
# Padding that matches the PyTorch module EXACTLY (including the quirk where a
# dim already divisible by the patch still gets a full extra patch of zeros
# whenever any other dim needs padding).
# ----------------------------------------------------------------------------
def _pytorch_style_pad(inputs, patch_size):
    pz, px, py = patch_size
    _, _, Z, X, Y = inputs.shape
    if (Z % pz != 0) or (X % px != 0) or (Y % py != 0):
        pad_z = pz - Z % pz
        pad_x = px - X % px
        pad_y = py - Y % py
        inputs = jnp.pad(
            inputs, ((0, 0), (0, 0), (0, pad_z), (0, pad_x), (0, pad_y)))
    return inputs


# ----------------------------------------------------------------------------
# One-time parameter preparation (hoisted out of the forward call)
# ----------------------------------------------------------------------------
def prepare_patch_embed_params(weight, bias):
    """Conv3d weight (E, C, pz, px, py), bias (E,) -> ((K, E) bf16, (1, E) f32)."""
    E = weight.shape[0]
    K = math.prod(weight.shape[1:])
    w2 = jnp.asarray(weight).reshape(E, K).T.astype(jnp.bfloat16)
    b2 = jnp.asarray(bias).reshape(1, E).astype(jnp.float32)
    return w2, b2


# ----------------------------------------------------------------------------
# PatchEmbed forward (glue in plain JAX, matmul in Pallas)
# ----------------------------------------------------------------------------
def patch_embed_forward(inputs, w2, b2, *, patch_size):
    """
    inputs: (B, C, Z, X, Y)  -- PyTorch NCDHW convention
    w2:     (K, E) bf16      -- from prepare_patch_embed_params
    b2:     (1, E) f32
    returns (B, N, E) in inputs.dtype, N = gz*gx*gy
    """
    pz, px, py = patch_size
    inputs = _pytorch_style_pad(inputs, patch_size)
    B, C, Z, X, Y = inputs.shape

    gz, gx, gy = Z // pz, X // px, Y // py
    N = gz * gx * gy
    K = C * pz * px * py
    E = w2.shape[1]
    out_dtype = inputs.dtype

    # Patch gather in bf16: the cast fuses into the transpose, halving the bytes
    # moved by this relayout pass and by the kernel's X_p read.  Patch index is
    # (gz, gx, gy) row-major, feature index (C, pz, px, py) row-major -> matches
    # conv3d(stride=kernel).flatten(2).transpose(1, 2).
    # TODO(synk): fully fusing this gather into the Pallas pipeline needs
    # in-kernel lane splitting (patch_size=4 is below the (8,128) tile), so the
    # relayout is left to XLA (single bf16 pass).
    x = inputs.astype(jnp.bfloat16)
    xp = x.reshape(B, C, gz, pz, gx, px, gy, py)
    xp = xp.transpose(0, 2, 4, 6, 1, 3, 5, 7)      # (B, gz, gx, gy, C, pz, px, py)
    xp = xp.reshape(B * N, K)

    out = _patch_matmul(xp, w2, b2, out_dtype=out_dtype)   # (B*N, E) Pallas hot path
    # norm_layer=None -> Identity (nothing to do).
    return out.reshape(B, N, E)


# ----------------------------------------------------------------------------
# Reference (pure JAX, f32 conv) for sanity checking
# ----------------------------------------------------------------------------
def patch_embed_reference(inputs, weight, bias, patch_size):
    pz, px, py = patch_size
    inputs = _pytorch_style_pad(inputs, patch_size)
    out = jax.lax.conv_general_dilated(
        inputs, weight,
        window_strides=(pz, px, py),
        padding="VALID",
        dimension_numbers=("NCDHW", "OIDHW", "NCDHW"),
    ) + bias.reshape(1, -1, 1, 1, 1)
    B, E, gz, gx, gy = out.shape
    return out.reshape(B, E, gz * gx * gy).transpose(0, 2, 1)


if __name__ == "__main__":
    # Module convention: image_size=(S//4, S, S), patch_size=4, in_channel=1.
    # Small demo: spatial (6, 16, 16) with Z=6 exercising the padding path
    # (matching the PyTorch quirk: X and Y each also gain a full extra patch).
    B, C = 2, 1
    Z, X, Y = 6, 16, 16
    patch_size = (4, 4, 4)
    embed_dim = 32

    key = jax.random.PRNGKey(0)
    k_in, k_w, k_b = jax.random.split(key, 3)

    x = jax.random.normal(k_in, (B, C, Z, X, Y), dtype=jnp.float32)
    weight = jax.random.normal(
        k_w, (embed_dim, C) + patch_size, dtype=jnp.float32) * 0.05
    bias = jax.random.normal(k_b, (embed_dim,), dtype=jnp.float32) * 0.05

    w2, b2 = prepare_patch_embed_params(weight, bias)     # once, at init time
    fwd = jax.jit(functools.partial(patch_embed_forward, patch_size=patch_size))
    out = jax.block_until_ready(fwd(x, w2, b2))

    ref = patch_embed_reference(x, weight, bias, patch_size)
    assert out.shape == ref.shape, (out.shape, ref.shape)
    # bf16 operands with f32 accumulation: ~0.5% relative error budget.
    assert jnp.allclose(out, ref, atol=2e-2, rtol=2e-2), "mismatch vs reference"

    print("KERNEL_OK")
</pallas_src>

<mosaic_0001>
module attributes {stable_mosaic.version = 11 : i64} {
  func.func @_patch_embed_kernel(%arg0: i32, %arg1: memref<104x64xbf16, #tpu.memory_space<vmem>>, %arg2: memref<64x32xbf16, #tpu.memory_space<vmem>>, %arg3: memref<1x32xf32, #tpu.memory_space<vmem>>, %arg4: memref<104x32xf32, #tpu.memory_space<vmem>>) attributes {dimension_semantics = [#tpu.dimension_semantics<parallel>], iteration_bounds = array<i64: 1>, scalar_prefetch = 0 : i64, scratch_operands = 0 : i64, tpu.core_type = #tpu.core_type<tc>, window_params = [{transform_indices = @transform_0, window_bounds = array<i64: 104, 64>}, {pipeline_mode = #tpu.pipeline_mode<synchronous>, transform_indices = @transform_1, window_bounds = array<i64: 64, 32>}, {pipeline_mode = #tpu.pipeline_mode<synchronous>, transform_indices = @transform_2, window_bounds = array<i64: 1, 32>}, {transform_indices = @transform_3, window_bounds = array<i64: 104, 32>}]} {
    %c0 = arith.constant 0 : index
    %c0_0 = arith.constant 0 : index
    %0 = vector.load %arg1[%c0, %c0_0] : memref<104x64xbf16, #tpu.memory_space<vmem>>, vector<104x64xbf16>
    %c0_1 = arith.constant 0 : index
    %c0_2 = arith.constant 0 : index
    %1 = vector.load %arg2[%c0_1, %c0_2] : memref<64x32xbf16, #tpu.memory_space<vmem>>, vector<64x32xbf16>
    %cst = arith.constant dense<0.000000e+00> : vector<104x32xf32>
    %2 = tpu.matmul %0, %1, %cst {dimension_numbers = #tpu.dot_dimension_numbers<[1], [0], [0], [1], [0, 0, 1, 1], [], []>} : vector<104x64xbf16>, vector<64x32xbf16>, vector<104x32xf32> -> vector<104x32xf32>
    %c0_3 = arith.constant 0 : index
    %c0_4 = arith.constant 0 : index
    %3 = vector.load %arg3[%c0_3, %c0_4] : memref<1x32xf32, #tpu.memory_space<vmem>>, vector<1x32xf32>
    %4 = vector.broadcast %3 : vector<1x32xf32> to vector<104x32xf32>
    %5 = arith.addf %2, %4 : vector<104x32xf32>
    %c0_5 = arith.constant 0 : index
    %c0_6 = arith.constant 0 : index
    %6 = vector.load %arg4[%c0_5, %c0_6] : memref<104x32xf32, #tpu.memory_space<vmem>>, vector<104x32xf32>
    tpu.vector_store %arg4[%c0_5, %c0_6], %5 {strides = array<i32>} : memref<104x32xf32, #tpu.memory_space<vmem>>, vector<104x32xf32>,
    return
  }
  func.func @transform_0(%arg0: i32) -> (i32, i32) {
    %c0_i32 = arith.constant 0 : i32
    %c0_i32_0 = arith.constant 0 : i32
    return %arg0, %c0_i32 : i32, i32
  }
  func.func @transform_1(%arg0: i32) -> (i32, i32) {
    %c0_i32 = arith.constant 0 : i32
    %c0_i32_0 = arith.constant 0 : i32
    %c0_i32_1 = arith.constant 0 : i32
    return %c0_i32, %c0_i32_0 : i32, i32
  }
  func.func @transform_2(%arg0: i32) -> (i32, i32) {
    %c0_i32 = arith.constant 0 : i32
    %c0_i32_0 = arith.constant 0 : i32
    %c0_i32_1 = arith.constant 0 : i32
    return %c0_i32, %c0_i32_0 : i32, i32
  }
  func.func @transform_3(%arg0: i32) -> (i32, i32) {
    %c0_i32 = arith.constant 0 : i32
    %c0_i32_0 = arith.constant 0 : i32
    return %arg0, %c0_i32 : i32, i32
  }
}

</mosaic_0001>

<llo_original>
// kernel: patch_embed_forward.1
$region0: #{patch_embed_forward.1}
  #allocation0 [shape = 'u32[]', space=smem, size = 0x4, offset = 0x4, fixed_abs, tag = 'smem constant byte address 0x4 - core index']
  #allocation1 [shape = 'u32[144,128]{1,0:T(1,128)}', space=vmem, size = 0x12000, scoped, tag = 'internal scratch']
  %s0 = inlined_call_operand.vmem [shape: bf16[100,64], index: 0, kind: input, shape index: {}]
  %s1 = inlined_call_operand.vmem [shape: bf16[64,32], index: 1, kind: input, shape index: {}]
  %s2 = inlined_call_operand.vmem [shape: f32[1,32], index: 2, kind: input, shape index: {}]
  %s3 = inlined_call_operand.vmem [shape: f32[100,32], index: 3, kind: output, shape index: {}]
  %s4 = sld [smem:[#allocation0]]
  $region22: #{patch_embed_forward.1} parent=0
    _
  %s6 = ssub.s32 1, %s4
  %s7 = scalar_select 0, %s6, %s4
  // Predicated region
  $region2: #{patch_embed_forward.1} parent=0 // pred_check
    _
  $region3: #{patch_embed_forward.1} parent=0 // pred_check_branch
    %9 = sbr.rel (0) target = $region5
  $region4: #{patch_embed_forward.1} parent=0 // pred_region
    _
  $region5: #{patch_embed_forward.1} parent=0 // pred_fallthru
    _
  // Predicated region
  $region6: #{patch_embed_forward.1} parent=0 // pred_check
    _
  $region7: #{patch_embed_forward.1} parent=0 // pred_check_branch
    %11 = sbr.rel (0) target = $region9
  $region8: #{patch_embed_forward.1} parent=0 // pred_region
    _
  $region9: #{patch_embed_forward.1} parent=0 // pred_fallthru
    _
  // Predicated region
  $region10: #{patch_embed_forward.1} parent=0 // pred_check
    _
  $region11: #{patch_embed_forward.1} parent=0 // pred_check_branch
    %13 = sbr.rel (0) target = $region13
  $region12: #{patch_embed_forward.1} parent=0 // pred_region
    _
  $region13: #{patch_embed_forward.1} parent=0 // pred_fallthru
    _
  %v15 = vld [vmem:[%s0] sm:$0xf]
  %v16 = vld [vmem:[%s0 + $0x4] sm:$0xf]
  %v17 = vld [vmem:[%s0 + $0x8] sm:$0xf]
  %v18 = vld [vmem:[%s0 + $0xc] sm:$0xf]
  %v19 = vld [vmem:[%s0 + $0x10] sm:$0xf]
  %v20 = vld [vmem:[%s0 + $0x14] sm:$0xf]
  %v21 = vld [vmem:[%s0 + $0x18] sm:$0xf]
  %v22 = vld [vmem:[%s0 + $0x1c] sm:$0xf]
  %v23 = vld [vmem:[%s0 + $0x20] sm:$0xf]
  %v24 = vld [vmem:[%s0 + $0x24] sm:$0xf]
  %v25 = vld [vmem:[%s0 + $0x28] sm:$0xf]
  %v26 = vld [vmem:[%s0 + $0x2c] sm:$0xf]
  %v27 = vld [vmem:[%s0 + $0x30] sm:$0xf]
  %v28 = vld [vmem:[%s1] sm:$0xf]
  %v29 = vld [vmem:[%s1 + $0x4] sm:$0xf]
  %v30 = vld [vmem:[%s1 + $0x8] sm:$0xf]
  %v31 = vld [vmem:[%s1 + $0xc] sm:$0xf]
  %v32 = vld [vmem:[%s1 + $0x10] sm:$0xf]
  %v33 = vld [vmem:[%s1 + $0x14] sm:$0xf]
  %v34 = vld [vmem:[%s1 + $0x18] sm:$0xf]
  %v35 = vld [vmem:[%s1 + $0x1c] sm:$0xf]
  %v36 = vld [vmem:[%s2] sm:$0x1]
  %v38 = vlaneseq
  %v39 = vshrl.u32 %v38, 7
  %v40 = vsub.s32 0, %v39
  %v41 = vrot.slane %v36, %v40
  %v56 = vunpack.c.l.b16 %v15
  %v57 = vunpack.c.l.b16 %v16
  %v58 = vunpack.c.l.b16 %v17
  %v59 = vunpack.c.l.b16 %v18
  %v60 = vunpack.c.l.b16 %v19
  %v61 = vunpack.c.l.b16 %v20
  %v62 = vunpack.c.l.b16 %v21
  %v63 = vunpack.c.l.b16 %v22
  %v64 = vunpack.c.l.b16 %v23
  %v65 = vunpack.c.l.b16 %v24
  %v66 = vunpack.c.l.b16 %v25
  %v67 = vunpack.c.l.b16 %v26
  %v68 = vunpack.c.l.b16 %v27
  %v69 = vpack.c.b16 %v57, %v56
  %v70 = vpack.c.b16 %v59, %v58
  %v71 = vpack.c.b16 %v61, %v60
  %v72 = vpack.c.b16 %v63, %v62
  %v73 = vpack.c.b16 %v65, %v64
  %v74 = vpack.c.b16 %v67, %v66
  %v75 = vpack.c.b16 %v68, %v68
  %v84 = vunpack.c.l.b16 %v28
  %v85 = vunpack.c.l.b16 %v29
  %v86 = vunpack.c.l.b16 %v30
  %v87 = vunpack.c.l.b16 %v31
  %v88 = vunpack.c.l.b16 %v32
  %v89 = vunpack.c.l.b16 %v33
  %v90 = vunpack.c.l.b16 %v34
  %v91 = vunpack.c.l.b16 %v35
  %v92 = vpack.c.b16 %v85, %v84
  %v93 = vpack.c.b16 %v87, %v86
  %v94 = vpack.c.b16 %v89, %v88
  %v95 = vpack.c.b16 %v91, %v90
  %vm100 = vcmask 523264
  %v102 = vsel %vm100, %v69, 0
  %v105 = vsel %vm100, %v70, 0
  %v108 = vsel %vm100, %v71, 0
  %v111 = vsel %vm100, %v72, 0
  %v114 = vsel %vm100, %v73, 0
  %v117 = vsel %vm100, %v74, 0
  %v120 = vsel %vm100, %v75, 0
  %122 = vmatprep.subr.bf16.mxu0 0
  %123 = vmatpush1.bf16.msra.mxu0 %v92
  %124 = vmatprep.subr.bf16.mxu0 0
  %125 = vmatpush1.bf16.msra.mxu0 %v93
  %126 = vmatprep.subr.bf16.mxu0 0
  %127 = vmatpush1.bf16.msra.mxu0 %v94
  %128 = vmatprep.subr.bf16.mxu0 0
  %129 = vmatpush1.bf16.msra.mxu0 %v95
  %130 = vmatprep.subr.bf16.mxu0 0
  %131 = vmatpush1.bf16.msra.mxu0 0
  %132 = vmatprep.subr.bf16.mxu0 0
  %133 = vmatpush1.bf16.msra.mxu0 0
  %134 = vmatprep.subr.bf16.mxu0 0
  %135 = vmatpush1.bf16.msra.mxu0 0
  %136 = vmatprep.subr.bf16.mxu0 0
  %137 = vmatpush1.bf16.msra.mxu0 0
  %138 = vmatprep.subr.bf16.mxu0 0
  %139 = vmatpush1.bf16.msra.mxu0 0
  %140 = vmatprep.subr.bf16.mxu0 0
  %141 = vmatpush1.bf16.msra.mxu0 0
  %142 = vmatprep.subr.bf16.mxu0 0
  %143 = vmatpush1.bf16.msra.mxu0 0
  %144 = vmatprep.subr.bf16.mxu0 0
  %145 = vmatpush1.bf16.msra.mxu0 0
  %146 = vmatprep.subr.bf16.mxu0 0
  %147 = vmatpush1.bf16.msra.mxu0 0
  %148 = vmatprep.subr.bf16.mxu0 0
  %149 = vmatpush1.bf16.msra.mxu0 0
  %150 = vmatprep.subr.bf16.mxu0 0
  %151 = vmatpush1.bf16.msra.mxu0 0
  %152 = vmatprep.subr.bf16.mxu0 0
  %153 = vmatpush1.bf16.msra.mxu0 0
  %154 = vmatprep.mubr.bf16.mxu0 0
  %155 = vmatmul.mubr.bf16.gmra.mrb[0].mxu0 %v102
  %v156 = vpop.f32.mrb[0].mxu0
  %v157 = vadd.f32 %v41, %v156
  %v158 = vpop.f32.mrb[0].mxu0
  %v159 = vpop.f32.mrb[0].mxu0
  %v160 = vadd.f32 %v41, %v159
  %v161 = vpop.f32.mrb[0].mxu0
  %162 = vmatprep.mubr.bf16.mxu0 0
  %163 = vmatmul.mubr.bf16.gmra.mrb[0].mxu0 %v105
  %v164 = vpop.f32.mrb[0].mxu0
  %v165 = vadd.f32 %v41, %v164
  %v166 = vpop.f32.mrb[0].mxu0
  %v167 = vpop.f32.mrb[0].mxu0
  %v168 = vadd.f32 %v41, %v167
  %v169 = vpop.f32.mrb[0].mxu0
  %170 = vmatprep.mubr.bf16.mxu0 0
  %171 = vmatmul.mubr.bf16.gmra.mrb[0].mxu0 %v108
  %v172 = vpop.f32.mrb[0].mxu0
  %v173 = vadd.f32 %v41, %v172
  %v174 = vpop.f32.mrb[0].mxu0
  %v175 = vpop.f32.mrb[0].mxu0
  %v176 = vadd.f32 %v41, %v175
  %v177 = vpop.f32.mrb[0].mxu0
  %178 = vmatprep.mubr.bf16.mxu0 0
  %179 = vmatmul.mubr.bf16.gmra.mrb[0].mxu0 %v111
  %v180 = vpop.f32.mrb[0].mxu0
  %v181 = vadd.f32 %v41, %v180
  %v182 = vpop.f32.mrb[0].mxu0
  %v183 = vpop.f32.mrb[0].mxu0
  %v184 = vadd.f32 %v41, %v183
  %v185 = vpop.f32.mrb[0].mxu0
  %186 = vmatprep.mubr.bf16.mxu0 0
  %187 = vmatmul.mubr.bf16.gmra.mrb[0].mxu0 %v114
  %v188 = vpop.f32.mrb[0].mxu0
  %v189 = vadd.f32 %v41, %v188
  %v190 = vpop.f32.mrb[0].mxu0
  %v191 = vpop.f32.mrb[0].mxu0
  %v192 = vadd.f32 %v41, %v191
  %v193 = vpop.f32.mrb[0].mxu0
  %194 = vmatprep.mubr.bf16.mxu0 0
  %195 = vmatmul.mubr.bf16.gmra.mrb[0].mxu0 %v117
  %v196 = vpop.f32.mrb[0].mxu0
  %v197 = vadd.f32 %v41, %v196
  %v198 = vpop.f32.mrb[0].mxu0
  %v199 = vpop.f32.mrb[0].mxu0
  %v200 = vadd.f32 %v41, %v199
  %v201 = vpop.f32.mrb[0].mxu0
  %202 = vmatprep.mubr.bf16.mxu0 0
  %203 = vmatmul.mubr.bf16.gmra.mrb[0].mxu0 %v120
  %v204 = vpop.f32.mrb[0].mxu0
  %v205 = vadd.f32 %v41, %v204
  %v206 = vpop.f32.mrb[0].mxu0
  %v207 = vpop.f32.mrb[0].mxu0
  %v208 = vpop.f32.mrb[0].mxu0
  %209 = vdwg.mxu0
  %vm210 = vcmask 261120
  %211 = vst.msk [vmem:[%s3] sm:$0xff] %vm210, %v157
  %212 = vst.msk [vmem:[%s3 + $0x8] sm:$0xff] %vm210, %v160
  %213 = vst.msk [vmem:[%s3 + $0x10] sm:$0xff] %vm210, %v165
  %214 = vst.msk [vmem:[%s3 + $0x18] sm:$0xff] %vm210, %v168
  %215 = vst.msk [vmem:[%s3 + $0x20] sm:$0xff] %vm210, %v173
  %216 = vst.msk [vmem:[%s3 + $0x28] sm:$0xff] %vm210, %v176
  %217 = vst.msk [vmem:[%s3 + $0x30] sm:$0xff] %vm210, %v181
  %218 = vst.msk [vmem:[%s3 + $0x38] sm:$0xff] %vm210, %v184
  %219 = vst.msk [vmem:[%s3 + $0x40] sm:$0xff] %vm210, %v189
  %220 = vst.msk [vmem:[%s3 + $0x48] sm:$0xff] %vm210, %v192
  %221 = vst.msk [vmem:[%s3 + $0x50] sm:$0xff] %vm210, %v197
  %222 = vst.msk [vmem:[%s3 + $0x58] sm:$0xff] %vm210, %v200
  %223 = vst.msk [vmem:[%s3 + $0x60] sm:$0xff] %vm210, %v205
  // Predicated region
  $region14: #{patch_embed_forward.1} parent=0 // pred_check
    _
  $region15: #{patch_embed_forward.1} parent=0 // pred_check_branch
    %225 = sbr.rel (0) target = $region17
  $region16: #{patch_embed_forward.1} parent=0 // pred_region
    _
  $region17: #{patch_embed_forward.1} parent=0 // pred_fallthru
    _
  // Predicated region
  $region18: #{patch_embed_forward.1} parent=0 // pred_check
    _
  $region19: #{patch_embed_forward.1} parent=0 // pred_check_branch
    %227 = sbr.rel (0) target = $region21
  $region20: #{patch_embed_forward.1} parent=0 // pred_region
    _
  $region21: #{patch_embed_forward.1} parent=0 // pred_fallthru
    _

</llo_original>
